<compile_context>
chip_gen: v7x
topology: tpu7x:2x2x1
jax: 0.10.0
libtpu: 0.0.40
codegen_flags: <defaults>
</compile_context>

<pallas_src>
import jax
import jax.numpy as jnp
import numpy as np
from jax.experimental import pallas as pl
from jax.experimental.pallas import tpu as pltpu


def _cdiv(a, b):
    return -(-a // b)


def _round_up(a, b):
    return _cdiv(a, b) * b


def _padded_vmem_bytes(shape, dtype):
    """Rough VMEM footprint of one block, padded to TPU tiles (conservative)."""
    itemsize = jnp.dtype(dtype).itemsize
    dims = list(shape)
    if len(dims) >= 1:
        dims[-1] = _round_up(dims[-1], 128)
    if len(dims) >= 2:
        dims[-2] = _round_up(dims[-2], 16)
    total = itemsize
    for d in dims:
        total *= d
    return total


def _combined_head_kernel(x_ref, w1_ref, b1_ref, w2_ref, b2_ref, out_ref):
    """One grid step = (one batch tile, one classifier).

    x_ref  : (tb, H)   float32   gathered token rows for this classifier
    w1_ref : (H, H)    bfloat16  dense weight, stored (in, out)
    b1_ref : (1, H)    float32
    w2_ref : (H, Lp)   bfloat16  out_proj weight, stored (in, out), labels padded to Lp
    b2_ref : (1, Lp)   float32
    out_ref: (tb, Lp)  float32   running max over classifiers (resident across j)
    """
    j = pl.program_id(1)

    x = x_ref[...].astype(jnp.bfloat16)                                      # (tb, H)
    h = jnp.dot(x, w1_ref[...], preferred_element_type=jnp.float32) + b1_ref[...]
    h = jnp.tanh(h)                                                          # (tb, H) f32
    logits = jnp.dot(h.astype(jnp.bfloat16), w2_ref[...],
                     preferred_element_type=jnp.float32) + b2_ref[...]       # (tb, Lp) f32

    @pl.when(j == 0)
    def _():
        out_ref[...] = logits.astype(out_ref.dtype)

    @pl.when(j > 0)
    def _():
        out_ref[...] = jnp.maximum(out_ref[...], logits.astype(out_ref.dtype))


def prepare_head_params(w1_pt, b1_pt, w2_pt, b2_pt, *, lane_pad=128):
    """One-time (model-load-time) conversion of PyTorch-layout per-classifier params.

    w1_pt: (n_cls, H, H)  dense.weight    (out, in)
    b1_pt: (n_cls, H)     dense.bias
    w2_pt: (n_cls, L, H)  out_proj.weight (out, in)
    b2_pt: (n_cls, L)     out_proj.bias

    Returns kernel-ready params: bf16 (in, out) weights with the label dim
    zero-padded to a multiple of `lane_pad`; f32 biases reshaped to (n_cls, 1, .).
    Doing the cast/pad here (not per forward call) avoids re-reading the full
    f32 weights from HBM on every invocation.
    """
    n_cls, H, H2 = w1_pt.shape
    assert H == H2
    L = w2_pt.shape[1]
    Lp = _round_up(L, lane_pad)

    w1 = jnp.transpose(w1_pt, (0, 2, 1)).astype(jnp.bfloat16)               # (n_cls, H, H)
    b1 = b1_pt.astype(jnp.float32).reshape(n_cls, 1, H)                      # (n_cls, 1, H)
    w2 = jnp.transpose(w2_pt, (0, 2, 1))                                     # (n_cls, H, L)
    w2 = jnp.pad(w2, ((0, 0), (0, 0), (0, Lp - L))).astype(jnp.bfloat16)     # (n_cls, H, Lp)
    b2 = jnp.pad(b2_pt.astype(jnp.float32), ((0, 0), (0, Lp - L)))
    b2 = b2.reshape(n_cls, 1, Lp)                                            # (n_cls, 1, Lp)
    return dict(w1=w1, b1=b1, w2=w2, b2=b2, num_labels=L)


def combined_roberta_head(features, params, *, segments):
    """
    features: (B, S, H) float32
    params:   output of prepare_head_params (bf16 weights, padded label dim)
    returns:  (B, num_labels) float32
    """
    B, S, H = features.shape
    w1, b1, w2, b2 = params["w1"], params["b1"], params["w2"], params["b2"]
    L = params["num_labels"]
    n_cls = w1.shape[0]
    Lp = w2.shape[-1]
    assert n_cls == segments + 1 and w1.shape == (n_cls, H, H)

    # Static token positions (match PyTorch: start_seg = 1, += S // segments each step).
    seg_len = S // segments
    token_idx = np.asarray([0] + [1 + i * seg_len for i in range(segments)], dtype=np.int32)

    # Wrapper-side gather of only the n_cls classifier tokens; the kernel never
    # touches the full (B, S, H) features array.
    x_tok = jnp.transpose(jnp.take(features, jnp.asarray(token_idx), axis=1),
                          (1, 0, 2)).astype(jnp.float32)                     # (n_cls, B, H)

    # Batch tiling: pad B to a sublane-friendly tile; aim for >=2 tiles when B is
    # large enough so the 'parallel' batch axis can shard across v7x's two TCs.
    if B > 8:
        tb = min(128, _round_up(_cdiv(B, 2), 8))
    else:
        tb = _round_up(max(B, 1), 8)
    B_pad = _round_up(B, tb)
    nb = B_pad // tb
    if B_pad != B:
        x_tok = jnp.pad(x_tok, ((0, 0), (0, B_pad - B), (0, 0)))

    # VMEM guard / limit derived from the actual per-step blocks (double-buffered),
    # capped at 48 MiB to leave headroom under v7x's 64 MiB physical VMEM.
    blocks = [((tb, H), jnp.float32),
              ((H, H), jnp.bfloat16),
              ((1, H), jnp.float32),
              ((H, Lp), jnp.bfloat16),
              ((1, Lp), jnp.float32),
              ((tb, Lp), jnp.float32)]
    est = sum(2 * _padded_vmem_bytes(s, d) for s, d in blocks)
    if est > 44 * 1024 * 1024:
        # TODO(synk): tile the hidden (contraction) dim if H ever grows this large.
        raise ValueError("combined_roberta_head: per-step blocks exceed the v7x VMEM budget; "
                         "add a contraction-dim tile.")
    vmem_limit = int(min(max(2 * est, 16 * 1024 * 1024), 48 * 1024 * 1024))

    cost = pl.CostEstimate(
        flops=2 * n_cls * B_pad * H * (H + Lp),
        transcendentals=n_cls * B_pad * H,
        bytes_accessed=int(x_tok.size * 4 + nb * (w1.size + w2.size) * 2
                           + (b1.size + b2.size) * 4 + B_pad * Lp * 4),
    )

    out_pad = pl.pallas_call(
        _combined_head_kernel,
        out_shape=jax.ShapeDtypeStruct((B_pad, Lp), jnp.float32),
        grid_spec=pltpu.PrefetchScalarGridSpec(
            num_scalar_prefetch=0,
            grid=(nb, n_cls),                       # classifier (reduction) axis innermost
            in_specs=[
                pl.BlockSpec((None, tb, H), lambda b, j: (j, b, 0)),   # gathered tokens
                pl.BlockSpec((None, H, H), lambda b, j: (j, 0, 0)),    # W1 (bf16)
                pl.BlockSpec((None, 1, H), lambda b, j: (j, 0, 0)),    # b1 (f32)
                pl.BlockSpec((None, H, Lp), lambda b, j: (j, 0, 0)),   # W2 (bf16, padded)
                pl.BlockSpec((None, 1, Lp), lambda b, j: (j, 0, 0)),   # b2 (f32, padded)
            ],
            out_specs=pl.BlockSpec((tb, Lp), lambda b, j: (b, 0)),     # max-accumulator
        ),
        compiler_params=pltpu.CompilerParams(
            dimension_semantics=("parallel", "arbitrary"),
            vmem_limit_bytes=vmem_limit,
        ),
        cost_estimate=cost,
    )(x_tok, w1, b1, w2, b2)

    return out_pad[:B, :L]


def _reference_bf16(features, params, *, segments):
    """Pure-JAX reference mirroring the kernel's bf16-weight/activation, f32-accum math."""
    B, S, H = features.shape
    seg_len = S // segments
    token_idx = [0] + [1 + i * seg_len for i in range(segments)]
    w1, b1, w2, b2 = params["w1"], params["b1"], params["w2"], params["b2"]
    L = params["num_labels"]
    outs = []
    for j, t in enumerate(token_idx):
        xj = features[:, t, :].astype(jnp.bfloat16)
        hj = jnp.tanh(jnp.dot(xj, w1[j], preferred_element_type=jnp.float32) + b1[j, 0])
        outs.append(jnp.dot(hj.astype(jnp.bfloat16), w2[j],
                            preferred_element_type=jnp.float32) + b2[j, 0])
    return jnp.max(jnp.stack(outs, axis=0), axis=0)[:, :L]


def _reference_f32(features, w1_pt, b1_pt, w2_pt, b2_pt, *, segments):
    """Pure f32 reference mirroring the PyTorch forward (eval mode, torch weight layout)."""
    B, S, H = features.shape
    seg_len = S // segments
    token_idx = [0] + [1 + i * seg_len for i in range(segments)]
    outs = []
    for j, t in enumerate(token_idx):
        xj = features[:, t, :]
        hj = jnp.tanh(xj @ w1_pt[j].T + b1_pt[j])
        outs.append(hj @ w2_pt[j].T + b2_pt[j])
    return jnp.max(jnp.stack(outs, axis=0), axis=0)


if __name__ == "__main__":
    # Small config consistent with the module's forward.
    B, S, H = 2, 16, 32
    segments = 4
    num_labels = 8
    n_cls = segments + 1

    key = jax.random.PRNGKey(0)
    k_feat, k_w1, k_b1, k_w2, k_b2 = jax.random.split(key, 5)

    features = jax.random.normal(k_feat, (B, S, H), dtype=jnp.float32)

    # Per-classifier parameters in PyTorch nn.Linear layout (out, in) / (out,).
    w1_pt = 0.1 * jax.random.normal(k_w1, (n_cls, H, H), dtype=jnp.float32)
    b1_pt = 0.1 * jax.random.normal(k_b1, (n_cls, H), dtype=jnp.float32)
    w2_pt = 0.1 * jax.random.normal(k_w2, (n_cls, num_labels, H), dtype=jnp.float32)
    b2_pt = 0.1 * jax.random.normal(k_b2, (n_cls, num_labels), dtype=jnp.float32)

    # One-time (load-time) conversion: (in,out) bf16 weights, padded label dim.
    params = prepare_head_params(w1_pt, b1_pt, w2_pt, b2_pt)

    out = combined_roberta_head(features, params, segments=segments)
    out = jax.block_until_ready(out)
    assert out.shape == (B, num_labels)

    # Tight check vs. a reference that mirrors the kernel's bf16 math exactly.
    ref_bf16 = _reference_bf16(features, params, segments=segments)
    np.testing.assert_allclose(np.asarray(out), np.asarray(ref_bf16),
                               rtol=5e-3, atol=5e-3)

    # Loose check vs. the full-f32 PyTorch-equivalent reference (bf16 drift).
    ref_f32 = _reference_f32(features, w1_pt, b1_pt, w2_pt, b2_pt, segments=segments)
    np.testing.assert_allclose(np.asarray(out), np.asarray(ref_f32),
                               rtol=5e-2, atol=5e-2)

    print("KERNEL_OK")
</pallas_src>

<mosaic_0001>
module attributes {stable_mosaic.version = 11 : i64} {
  func.func @_combined_head_kernel(%arg0: i32, %arg1: i32, %arg2: memref<1x8x32xf32, #tpu.memory_space<vmem>>, %arg3: memref<1x32x32xbf16, #tpu.memory_space<vmem>>, %arg4: memref<1x1x32xf32, #tpu.memory_space<vmem>>, %arg5: memref<1x32x128xbf16, #tpu.memory_space<vmem>>, %arg6: memref<1x1x128xf32, #tpu.memory_space<vmem>>, %arg7: memref<8x128xf32, #tpu.memory_space<vmem>>) attributes {dimension_semantics = [#tpu.dimension_semantics<parallel>, #tpu.dimension_semantics<arbitrary>], iteration_bounds = array<i64: 1, 5>, scalar_prefetch = 0 : i64, scratch_operands = 0 : i64, tpu.core_type = #tpu.core_type<tc>, window_params = [{transform_indices = @transform_0, window_bounds = array<i64: 1, 8, 32>}, {transform_indices = @transform_1, window_bounds = array<i64: 1, 32, 32>}, {transform_indices = @transform_2, window_bounds = array<i64: 1, 1, 32>}, {transform_indices = @transform_3, window_bounds = array<i64: 1, 32, 128>}, {transform_indices = @transform_4, window_bounds = array<i64: 1, 1, 128>}, {transform_indices = @transform_5, window_bounds = array<i64: 8, 128>}]} {
    %c0 = arith.constant 0 : index
    %c0_0 = arith.constant 0 : index
    %c0_1 = arith.constant 0 : index
    %0 = vector.load %arg2[%c0, %c0_0, %c0_1] : memref<1x8x32xf32, #tpu.memory_space<vmem>>, vector<1x8x32xf32>
    %1 = vector.shape_cast %0 : vector<1x8x32xf32> to vector<8x32xf32>
    %2 = arith.truncf %1 : vector<8x32xf32> to vector<8x32xbf16>
    %c0_2 = arith.constant 0 : index
    %c0_3 = arith.constant 0 : index
    %c0_4 = arith.constant 0 : index
    %3 = vector.load %arg3[%c0_2, %c0_3, %c0_4] : memref<1x32x32xbf16, #tpu.memory_space<vmem>>, vector<1x32x32xbf16>
    %4 = vector.shape_cast %3 : vector<1x32x32xbf16> to vector<32x32xbf16>
    %cst = arith.constant dense<0.000000e+00> : vector<8x32xf32>
    %5 = tpu.matmul %2, %4, %cst {dimension_numbers = #tpu.dot_dimension_numbers<[1], [0], [0], [1], [0, 0, 1, 1], [], []>} : vector<8x32xbf16>, vector<32x32xbf16>, vector<8x32xf32> -> vector<8x32xf32>
    %c0_5 = arith.constant 0 : index
    %c0_6 = arith.constant 0 : index
    %c0_7 = arith.constant 0 : index
    %6 = vector.load %arg4[%c0_5, %c0_6, %c0_7] : memref<1x1x32xf32, #tpu.memory_space<vmem>>, vector<1x1x32xf32>
    %7 = vector.shape_cast %6 : vector<1x1x32xf32> to vector<1x32xf32>
    %8 = vector.broadcast %7 : vector<1x32xf32> to vector<8x32xf32>
    %9 = arith.addf %5, %8 : vector<8x32xf32>
    %10 = math.tanh %9 : vector<8x32xf32>
    %11 = arith.truncf %10 : vector<8x32xf32> to vector<8x32xbf16>
    %c0_8 = arith.constant 0 : index
    %c0_9 = arith.constant 0 : index
    %c0_10 = arith.constant 0 : index
    %12 = vector.load %arg5[%c0_8, %c0_9, %c0_10] : memref<1x32x128xbf16, #tpu.memory_space<vmem>>, vector<1x32x128xbf16>
    %13 = vector.shape_cast %12 : vector<1x32x128xbf16> to vector<32x128xbf16>
    %cst_11 = arith.constant dense<0.000000e+00> : vector<8x128xf32>
    %14 = tpu.matmul %11, %13, %cst_11 {dimension_numbers = #tpu.dot_dimension_numbers<[1], [0], [0], [1], [0, 0, 1, 1], [], []>} : vector<8x32xbf16>, vector<32x128xbf16>, vector<8x128xf32> -> vector<8x128xf32>
    %c0_12 = arith.constant 0 : index
    %c0_13 = arith.constant 0 : index
    %c0_14 = arith.constant 0 : index
    %15 = vector.load %arg6[%c0_12, %c0_13, %c0_14] : memref<1x1x128xf32, #tpu.memory_space<vmem>>, vector<1x1x128xf32>
    %16 = vector.shape_cast %15 : vector<1x1x128xf32> to vector<1x128xf32>
    %17 = vector.broadcast %16 : vector<1x128xf32> to vector<8x128xf32>
    %18 = arith.addf %14, %17 : vector<8x128xf32>
    %c0_i32 = arith.constant 0 : i32
    %19 = arith.cmpi eq, %arg1, %c0_i32 : i32
    %20 = arith.extui %19 : i1 to i32
    %c0_i32_15 = arith.constant 0 : i32
    %21 = arith.cmpi ne, %20, %c0_i32_15 : i32
    scf.if %21 {
      %c0_18 = arith.constant 0 : index
      %c0_19 = arith.constant 0 : index
      %25 = vector.load %arg7[%c0_18, %c0_19] : memref<8x128xf32, #tpu.memory_space<vmem>>, vector<8x128xf32>
      tpu.vector_store %arg7[%c0_18, %c0_19], %18 {strides = array<i32>} : memref<8x128xf32, #tpu.memory_space<vmem>>, vector<8x128xf32>,
    } else {
    }
    %c0_i32_16 = arith.constant 0 : i32
    %22 = arith.cmpi sgt, %arg1, %c0_i32_16 : i32
    %23 = arith.extui %22 : i1 to i32
    %c0_i32_17 = arith.constant 0 : i32
    %24 = arith.cmpi ne, %23, %c0_i32_17 : i32
    scf.if %24 {
      %c0_18 = arith.constant 0 : index
      %c0_19 = arith.constant 0 : index
      %25 = vector.load %arg7[%c0_18, %c0_19] : memref<8x128xf32, #tpu.memory_space<vmem>>, vector<8x128xf32>
      %26 = arith.maximumf %25, %18 : vector<8x128xf32>
      %c0_20 = arith.constant 0 : index
      %c0_21 = arith.constant 0 : index
      %27 = vector.load %arg7[%c0_20, %c0_21] : memref<8x128xf32, #tpu.memory_space<vmem>>, vector<8x128xf32>
      tpu.vector_store %arg7[%c0_20, %c0_21], %26 {strides = array<i32>} : memref<8x128xf32, #tpu.memory_space<vmem>>, vector<8x128xf32>,
    } else {
    }
    return
  }
  func.func @transform_0(%arg0: i32, %arg1: i32) -> (i32, i32, i32) {
    %c0_i32 = arith.constant 0 : i32
    %c0_i32_0 = arith.constant 0 : i32
    return %arg1, %arg0, %c0_i32 : i32, i32, i32
  }
  func.func @transform_1(%arg0: i32, %arg1: i32) -> (i32, i32, i32) {
    %c0_i32 = arith.constant 0 : i32
    %c0_i32_0 = arith.constant 0 : i32
    %c0_i32_1 = arith.constant 0 : i32
    return %arg1, %c0_i32, %c0_i32_0 : i32, i32, i32
  }
  func.func @transform_2(%arg0: i32, %arg1: i32) -> (i32, i32, i32) {
    %c0_i32 = arith.constant 0 : i32
    %c0_i32_0 = arith.constant 0 : i32
    %c0_i32_1 = arith.constant 0 : i32
    return %arg1, %c0_i32, %c0_i32_0 : i32, i32, i32
  }
  func.func @transform_3(%arg0: i32, %arg1: i32) -> (i32, i32, i32) {
    %c0_i32 = arith.constant 0 : i32
    %c0_i32_0 = arith.constant 0 : i32
    %c0_i32_1 = arith.constant 0 : i32
    return %arg1, %c0_i32, %c0_i32_0 : i32, i32, i32
  }
  func.func @transform_4(%arg0: i32, %arg1: i32) -> (i32, i32, i32) {
    %c0_i32 = arith.constant 0 : i32
    %c0_i32_0 = arith.constant 0 : i32
    %c0_i32_1 = arith.constant 0 : i32
    return %arg1, %c0_i32, %c0_i32_0 : i32, i32, i32
  }
  func.func @transform_5(%arg0: i32, %arg1: i32) -> (i32, i32) {
    %c0_i32 = arith.constant 0 : i32
    %c0_i32_0 = arith.constant 0 : i32
    return %arg0, %c0_i32 : i32, i32
  }
}

</mosaic_0001>

<llo_original>
// kernel: tpu_custom_call.1
$region0: #{tpu_custom_call.1}
  #allocation0 [shape = 'u32[]', space=smem, size = 0x4, offset = 0x4, fixed_abs, tag = 'smem constant byte address 0x4 - core index']
  #allocation1 [shape = 'u32[144,128]{1,0:T(1,128)}', space=vmem, size = 0x12000, scoped, tag = 'internal scratch']
  %s0 = inlined_call_operand.hbm [shape: f32[5,8,32], index: 0, kind: input, shape index: {}]
  %s1 = inlined_call_operand.hbm [shape: bf16[5,32,32], index: 1, kind: input, shape index: {}]
  %s2 = inlined_call_operand.vmem [shape: f32[5,1,32], index: 2, kind: input, shape index: {}]
  %s3 = inlined_call_operand.hbm [shape: bf16[5,32,128], index: 3, kind: input, shape index: {}]
  %s4 = inlined_call_operand.vmem [shape: f32[5,1,128], index: 4, kind: input, shape index: {}]
  %s5 = inlined_call_operand.hbm [shape: f32[8,128], index: 5, kind: output, shape index: {}]
  %s6 = sld [smem:[#allocation0]]
  $region73: #{tpu_custom_call.1} parent=0
    _
  %s8 = ssub.s32 1, %s6
  %s9 = scalar_select 0, %s8, %s6
  $region1: #{tpu_custom_call.1} parent=0
    #allocation2 [shape = 'u8[8192]{0}', space=vmem, size = 0x2000, scoped, tag = 'input window, operand 0']
    #allocation3 [shape = 's32[2]{0}', space=sflag, size = 0x8, scoped, tag = 'scoped memory for tpu_custom_call.1']
    #allocation4 [shape = 's32[2]{0}', space=sflag, size = 0x8, scoped, tag = 'scoped memory for tpu_custom_call.1']
    #allocation5 [shape = 'u8[16384]{0}', space=vmem, size = 0x4000, scoped, tag = 'input window, operand 1']
    #allocation6 [shape = 's32[2]{0}', space=sflag, size = 0x8, scoped, tag = 'scoped memory for tpu_custom_call.1']
    #allocation7 [shape = 'u8[16384]{0}', space=vmem, size = 0x4000, scoped, tag = 'input window, operand 3']
    #allocation8 [shape = 'u8[4096]{0}', space=vmem, size = 0x1000, scoped, tag = 'output window, operand 0, single buffered']
    %10 = vsyncpa [#allocation3], 0
    %s11 = scalar_lea.sflag [#allocation3], 1
    %12 = vsyncpa %s11, 0
    %13 = vsyncpa [#allocation6], 0
    %s14 = scalar_lea.sflag [#allocation6], 1
    %15 = vsyncpa %s14, 0
    %16 = vsyncpa [#allocation4], 0
    loop: start=0, step=1, limit=7
    $region2: #{tpu_custom_call.1} parent=1 // loop_pre_header
      _
    $region3: #{tpu_custom_call.1} parent=1 // loop_header
      %s18 = sphi 0, %s22
      %p19 = scmp.ge.s32.totalorder %s18, 7
      %s25 = sphi 0, %s37
      %s26 = sphi 0, %s33
      %s27 = sphi 0, %s25
      %s28 = sphi 0, %s26
      %s29 = sphi 0, %s27
      %s30 = sphi 0, %s28
      %s42 = sphi 0, %s44
      %s45 = sphi 0, %s42
      %s46 = sphi 0, %s45
      %s62 = sphi 0, %s46
      %s68 = sphi 0, %s70
      %s71 = sphi 0, %s68
      %s72 = sphi 0, %s71
      %s88 = sphi 0, %s72
      %s94 = sphi 0, %s96
      %s97 = sphi 0, %s94
      %s98 = sphi 0, %s97
      %s114 = sphi 0, %s98
      %s120 = sphi 0, %s122
      %s123 = sphi 0, %s120
      %s124 = sphi 0, %s123
      %s140 = sphi 0, %s124
      %s146 = sphi 0, %s148
      %s149 = sphi 0, %s146
      %s150 = sphi 0, %s149
      %s166 = sphi 0, %s150
      %s172 = sphi 0, %s174
      %s175 = sphi 0, %s172
      %s176 = sphi 0, %s175
      %s192 = sphi 0, %s176
    $region4: #{tpu_custom_call.1} parent=1 // loop_header_branch
      %21 = sbr.rel (%p19) target = $region8
    $region5: #{tpu_custom_call.1} parent=1 // loop_body
      %s23 = ssub.s32 %s18, 1
      %s24 = ssub.s32 %s18, 2
      %s31 = sadd.s32 1, %s26
      %p32 = scmp.ge.s32.totalorder %s31, 5
      %s33 = scalar_select %p32, 0, %s31
      %s34 = sadd.s32 1, %s25
      %s35 = scalar_select %p32, %s34, %s25
      %p36 = scmp.ge.s32.totalorder %s35, 1
      %s37 = scalar_select %p36, 0, %s35
      %s38 = ssub.s32 %s26, %s33
      %s39 = ssub.s32 %s25, %s37
      %s40 = sor.u32 %s38, %s39
      %p41 = scmp.eq.s32.totalorder %s40, 0
      %s43 = sadd.s32 %s42, 1
      %s44 = scalar_select %p41, %s42, %s43
      %p47 = pneg %p41
      %p48 = scmp.eq.s32.totalorder %s18, 4
      %p49 = por %p47, %p48
      %p50 = scmp.ne.s32.totalorder %s42, %s45
      %p51 = scmp.eq.s32.totalorder %s18, 0
      %p52 = por %p50, %p51
      %p53 = scmp.ne.s32.totalorder %s42, %s45
      %p54 = scmp.eq.s32.totalorder %s23, 4
      %p55 = por %p53, %p54
      %p56 = scmp.ne.s32.totalorder %s45, %s46
      %p57 = scmp.eq.s32.totalorder %s23, 0
      %p58 = por %p56, %p57
      %p59 = scmp.ne.s32.totalorder %s45, %s46
      %p60 = scmp.eq.s32.totalorder %s24, 4
      %p61 = por %p59, %p60
      %p63 = scmp.ne.s32.totalorder %s46, %s62
      %p64 = scmp.eq.s32.totalorder %s24, 0
      %p65 = por %p63, %p64
      %s66 = ssub.s32 %s26, %s33
      %p67 = scmp.eq.s32.totalorder %s66, 0
      %s69 = sadd.s32 %s68, 1
      %s70 = scalar_select %p67, %s68, %s69
      %p73 = pneg %p67
      %p74 = scmp.eq.s32.totalorder %s18, 4
      %p75 = por %p73, %p74
      %p76 = scmp.ne.s32.totalorder %s68, %s71
      %p77 = scmp.eq.s32.totalorder %s18, 0
      %p78 = por %p76, %p77
      %p79 = scmp.ne.s32.totalorder %s68, %s71
      %p80 = scmp.eq.s32.totalorder %s23, 4
      %p81 = por %p79, %p80
      %p82 = scmp.ne.s32.totalorder %s71, %s72
      %p83 = scmp.eq.s32.totalorder %s23, 0
      %p84 = por %p82, %p83
      %p85 = scmp.ne.s32.totalorder %s71, %s72
      %p86 = scmp.eq.s32.totalorder %s24, 4
      %p87 = por %p85, %p86
      %p89 = scmp.ne.s32.totalorder %s72, %s88
      %p90 = scmp.eq.s32.totalorder %s24, 0
      %p91 = por %p89, %p90
      %s92 = ssub.s32 %s26, %s33
      %p93 = scmp.eq.s32.totalorder %s92, 0
      %s95 = sadd.s32 %s94, 1
      %s96 = scalar_select %p93, %s94, %s95
      %p99 = pneg %p93
      %p100 = scmp.eq.s32.totalorder %s18, 4
      %p101 = por %p99, %p100
      %p102 = scmp.ne.s32.totalorder %s94, %s97
      %p103 = scmp.eq.s32.totalorder %s18, 0
      %p104 = por %p102, %p103
      %p105 = scmp.ne.s32.totalorder %s94, %s97
      %p106 = scmp.eq.s32.totalorder %s23, 4
      %p107 = por %p105, %p106
      %p108 = scmp.ne.s32.totalorder %s97, %s98
      %p109 = scmp.eq.s32.totalorder %s23, 0
      %p110 = por %p108, %p109
      %p111 = scmp.ne.s32.totalorder %s97, %s98
      %p112 = scmp.eq.s32.totalorder %s24, 4
      %p113 = por %p111, %p112
      %p115 = scmp.ne.s32.totalorder %s98, %s114
      %p116 = scmp.eq.s32.totalorder %s24, 0
      %p117 = por %p115, %p116
      %s118 = ssub.s32 %s26, %s33
      %p119 = scmp.eq.s32.totalorder %s118, 0
      %s121 = sadd.s32 %s120, 1
      %s122 = scalar_select %p119, %s120, %s121
      %p125 = pneg %p119
      %p126 = scmp.eq.s32.totalorder %s18, 4
      %p127 = por %p125, %p126
      %p128 = scmp.ne.s32.totalorder %s120, %s123
      %p129 = scmp.eq.s32.totalorder %s18, 0
      %p130 = por %p128, %p129
      %p131 = scmp.ne.s32.totalorder %s120, %s123
      %p132 = scmp.eq.s32.totalorder %s23, 4
      %p133 = por %p131, %p132
      %p134 = scmp.ne.s32.totalorder %s123, %s124
      %p135 = scmp.eq.s32.totalorder %s23, 0
      %p136 = por %p134, %p135
      %p137 = scmp.ne.s32.totalorder %s123, %s124
      %p138 = scmp.eq.s32.totalorder %s24, 4
      %p139 = por %p137, %p138
      %p141 = scmp.ne.s32.totalorder %s124, %s140
      %p142 = scmp.eq.s32.totalorder %s24, 0
      %p143 = por %p141, %p142
      %s144 = ssub.s32 %s26, %s33
      %p145 = scmp.eq.s32.totalorder %s144, 0
      %s147 = sadd.s32 %s146, 1
      %s148 = scalar_select %p145, %s146, %s147
      %p151 = pneg %p145
      %p152 = scmp.eq.s32.totalorder %s18, 4
      %p153 = por %p151, %p152
      %p154 = scmp.ne.s32.totalorder %s146, %s149
      %p155 = scmp.eq.s32.totalorder %s18, 0
      %p156 = por %p154, %p155
      %p157 = scmp.ne.s32.totalorder %s146, %s149
      %p158 = scmp.eq.s32.totalorder %s23, 4
      %p159 = por %p157, %p158
      %p160 = scmp.ne.s32.totalorder %s149, %s150
      %p161 = scmp.eq.s32.totalorder %s23, 0
      %p162 = por %p160, %p161
      %p163 = scmp.ne.s32.totalorder %s149, %s150
      %p164 = scmp.eq.s32.totalorder %s24, 4
      %p165 = por %p163, %p164
      %p167 = scmp.ne.s32.totalorder %s150, %s166
      %p168 = scmp.eq.s32.totalorder %s24, 0
      %p169 = por %p167, %p168
      %s170 = ssub.s32 %s25, %s37
      %p171 = scmp.eq.s32.totalorder %s170, 0
      %s173 = sadd.s32 %s172, 1
      %s174 = scalar_select %p171, %s172, %s173
      %p177 = pneg %p171
      %p178 = scmp.eq.s32.totalorder %s18, 4
      %p179 = por %p177, %p178
      %p180 = scmp.ne.s32.totalorder %s172, %s175
      %p181 = scmp.eq.s32.totalorder %s18, 0
      %p182 = por %p180, %p181
      %p183 = scmp.ne.s32.totalorder %s172, %s175
      %p184 = scmp.eq.s32.totalorder %s23, 4
      %p185 = por %p183, %p184
      %p186 = scmp.ne.s32.totalorder %s175, %s176
      %p187 = scmp.eq.s32.totalorder %s23, 0
      %p188 = por %p186, %p187
      %p189 = scmp.ne.s32.totalorder %s175, %s176
      %p190 = scmp.eq.s32.totalorder %s24, 4
      %p191 = por %p189, %p190
      %p193 = scmp.ne.s32.totalorder %s176, %s192
      %p194 = scmp.eq.s32.totalorder %s24, 0
      %p195 = por %p193, %p194
      %p196 = scmp.le.s32.totalorder 1, %s18
      %p197 = scmp.lt.s32.totalorder %s18, 6
      %p198 = pnand %p196, %p197
      %p199 = pneg %p198
      // Predicated region
      $region9: #{tpu_custom_call.1} parent=5 // pred_check
        _
      $region10: #{tpu_custom_call.1} parent=5 // pred_check_branch
        %201 = sbr.rel (%p198) target = $region12
      $region11: #{tpu_custom_call.1} parent=5 // pred_region
        %s202 = ssub.s32 %s18, 1
      $region12: #{tpu_custom_call.1} parent=5 // pred_fallthru
        _
      %p203 = scmp.lt.s32.totalorder %s18, 5
      // Predicated region
      $region13: #{tpu_custom_call.1} parent=5 // pred_check
        %p204 = pneg %p203
      $region14: #{tpu_custom_call.1} parent=5 // pred_check_branch
        %206 = sbr.rel (%p204) target = $region16
      $region15: #{tpu_custom_call.1} parent=5 // pred_region
        // Predicated region
        $region17: #{tpu_custom_call.1} parent=15 // pred_check
          %p207 = pneg %p52
        $region18: #{tpu_custom_call.1} parent=15 // pred_check_branch
          %209 = sbr.rel (%p207) target = $region20
        $region19: #{tpu_custom_call.1} parent=15 // pred_region
          %s210 = sand.u32 %s42, 1
          %s211 = scalar_lea.sflag [#allocation3], %s210
          %s212 = sand.u32 %s42, 1
          %s213 = smul.addr %s212, 8
          %s214 = scalar_lea.vmem [#allocation2], %s213
          %s216 = ssub.s32 128, 128
          %217 = vsyncadd %s211, %s216
          %s218 = sadd.s32 %s25, %s26
          %s219 = smul.addr %s218, 128
          %s220 = scalar_lea.hbm %s0, %s219
          %s222 = sshll.u32 %s214, 4
          %s223 = int_to_ptr.vmem [resolvable:$true] %s222
          %225 = dma.hbm_to_vmem [thread:$0]  %s220, 128, %s223, %s211
        $region20: #{tpu_custom_call.1} parent=15 // pred_fallthru
          _
        // Predicated region
        $region21: #{tpu_custom_call.1} parent=15 // pred_check
          %p226 = pneg %p78
        $region22: #{tpu_custom_call.1} parent=15 // pred_check_branch
          %228 = sbr.rel (%p226) target = $region24
        $region23: #{tpu_custom_call.1} parent=15 // pred_region
          %s229 = sand.u32 %s18, 1
          %s230 = scalar_lea.sflag [#allocation6], %s229
          %s231 = sand.u32 %s68, 1
          %s232 = smul.addr %s231, 16
          %s233 = scalar_lea.vmem [#allocation5], %s232
          %s235 = ssub.s32 256, 256
          %236 = vsyncadd %s230, %s235
          %s237 = smul.addr %s26, 4
          %s238 = smul.addr %s237, 64
          %s239 = scalar_lea.hbm %s1, %s238
          %s240 = sshll.u32 %s233, 4
          %s241 = int_to_ptr.vmem [resolvable:$true] %s240
          %246 = dma.hbm_to_vmem [thread:$0]  %s239, 256, %s241, %s230, 64, 64, 4
        $region24: #{tpu_custom_call.1} parent=15 // pred_fallthru
          _
        // Predicated region
        $region25: #{tpu_custom_call.1} parent=15 // pred_check
          %p247 = pneg %p104
        $region26: #{tpu_custom_call.1} parent=15 // pred_check_branch
          %249 = sbr.rel (%p247) target = $region28
        $region27: #{tpu_custom_call.1} parent=15 // pred_region
          %p250 = scmp.lt.s32.totalorder %s26, 4
          %s251 = scalar_select %p250, %s26, 4
          %s252 = scalar_lea.vmem %s2, %s251
        $region28: #{tpu_custom_call.1} parent=15 // pred_fallthru
          _
        // Predicated region
        $region29: #{tpu_custom_call.1} parent=15 // pred_check
          %p253 = pneg %p130
        $region30: #{tpu_custom_call.1} parent=15 // pred_check_branch
          %255 = sbr.rel (%p253) target = $region32
        $region31: #{tpu_custom_call.1} parent=15 // pred_region
          %s256 = sand.u32 %s18, 1
          %s257 = scalar_lea.sflag [#allocation6], %s256
          %s258 = sand.u32 %s120, 1
          %s259 = smul.addr %s258, 16
          %s260 = scalar_lea.vmem [#allocation7], %s259
          %s262 = ssub.s32 256, 256
          %263 = vsyncadd %s257, %s262
          %s264 = smul.addr %s26, 4
          %s265 = smul.addr %s264, 64
          %s266 = scalar_lea.hbm %s3, %s265
          %s267 = sshll.u32 %s260, 4
          %s268 = int_to_ptr.vmem [resolvable:$true] %s267
          %273 = dma.hbm_to_vmem [thread:$0]  %s266, 256, %s268, %s257, 64, 64, 4
        $region32: #{tpu_custom_call.1} parent=15 // pred_fallthru
          _
        // Predicated region
        $region33: #{tpu_custom_call.1} parent=15 // pred_check
          %p274 = pneg %p156
        $region34: #{tpu_custom_call.1} parent=15 // pred_check_branch
          %276 = sbr.rel (%p274) target = $region36
        $region35: #{tpu_custom_call.1} parent=15 // pred_region
          %p277 = scmp.lt.s32.totalorder %s26, 4
          %s278 = scalar_select %p277, %s26, 4
          %s279 = scalar_lea.vmem %s4, %s278
        $region36: #{tpu_custom_call.1} parent=15 // pred_fallthru
          _
      $region16: #{tpu_custom_call.1} parent=5 // pred_fallthru
        _
      %p280 = scmp.le.s32.totalorder 1, %s18
      %p281 = scmp.lt.s32.totalorder %s18, 6
      %p282 = pnand %p280, %p281
      %p283 = pneg %p282
      // Predicated region
      $region37: #{tpu_custom_call.1} parent=5 // pred_check
        _
      $region38: #{tpu_custom_call.1} parent=5 // pred_check_branch
        %285 = sbr.rel (%p282) target = $region40
      $region39: #{tpu_custom_call.1} parent=5 // pred_region
        %s286 = ssub.s32 %s18, 1
        %s287 = sand.u32 %s45, 1
        %s288 = scalar_lea.sflag [#allocation3], %s287
        %s289 = sand.u32 %s45, 1
        %s290 = smul.addr %s289, 8
        %s291 = scalar_lea.vmem [#allocation2], %s290
        // Predicated region
        $region41: #{tpu_custom_call.1} parent=39 // pred_check
          %p292 = pneg %p58
        $region42: #{tpu_custom_call.1} parent=39 // pred_check_branch
          %294 = sbr.rel (%p292) target = $region44
        $region43: #{tpu_custom_call.1} parent=39 // pred_region
          %295 = dma.done %s288, 128
        $region44: #{tpu_custom_call.1} parent=39 // pred_fallthru
          _
        %s296 = sand.u32 %s23, 1
        %s297 = scalar_lea.sflag [#allocation6], %s296
        %s298 = sand.u32 %s71, 1
        %s299 = smul.addr %s298, 16
        %s300 = scalar_lea.vmem [#allocation5], %s299
        // Predicated region
        $region45: #{tpu_custom_call.1} parent=39 // pred_check
          %p301 = pneg %p84
        $region46: #{tpu_custom_call.1} parent=39 // pred_check_branch
          %303 = sbr.rel (%p301) target = $region48
        $region47: #{tpu_custom_call.1} parent=39 // pred_region
          %304 = dma.done %s297, 256
        $region48: #{tpu_custom_call.1} parent=39 // pred_fallthru
          _
        %s305 = sand.u32 %s23, 1
        %s306 = scalar_lea.sflag [#allocation6], %s305
        %s307 = sand.u32 %s123, 1
        %s308 = smul.addr %s307, 16
        %s309 = scalar_lea.vmem [#allocation7], %s308
        // Predicated region
        $region49: #{tpu_custom_call.1} parent=39 // pred_check
          %p310 = pneg %p136
        $region50: #{tpu_custom_call.1} parent=39 // pred_check_branch
          %312 = sbr.rel (%p310) target = $region52
        $region51: #{tpu_custom_call.1} parent=39 // pred_region
          %313 = dma.done %s306, 256
        $region52: #{tpu_custom_call.1} parent=39 // pred_fallthru
          _
        %s314 = sand.u32 %s45, 1
        %s315 = scalar_lea.sflag [#allocation3], %s314
        %s316 = sand.u32 %s45, 1
        %s317 = smul.addr %s316, 8
        %s318 = scalar_lea.vmem [#allocation2], %s317
        %p319 = pneg %p58
        %p320 = pneg %p55
        %s321 = sand.u32 %s23, 1
        %s322 = scalar_lea.sflag [#allocation6], %s321
        %s323 = sand.u32 %s71, 1
        %s324 = smul.addr %s323, 16
        %s325 = scalar_lea.vmem [#allocation5], %s324
        %p326 = pneg %p84
        %p327 = pneg %p81
        %p328 = scmp.lt.s32.totalorder %s28, 4
        %s329 = scalar_select %p328, %s28, 4
        %s330 = scalar_lea.vmem %s2, %s329
        %p331 = pneg %p110
        %p332 = pneg %p107
        %s333 = sand.u32 %s23, 1
        %s334 = scalar_lea.sflag [#allocation6], %s333
        %s335 = sand.u32 %s123, 1
        %s336 = smul.addr %s335, 16
        %s337 = scalar_lea.vmem [#allocation7], %s336
        %p338 = pneg %p136
        %p339 = pneg %p133
        %p340 = scmp.lt.s32.totalorder %s28, 4
        %s341 = scalar_select %p340, %s28, 4
        %s342 = scalar_lea.vmem %s4, %s341
        %p343 = pneg %p162
        %p344 = pneg %p159
        %p345 = pneg %p188
        %p346 = pneg %p185
        %p347 = scmp.lt.s32.totalorder %s28, 4
        %s348 = scalar_select %p347, %s28, 4
        %s349 = scalar_lea.vmem %s2, %s348
        %p350 = scmp.lt.s32.totalorder %s28, 4
        %s351 = scalar_select %p350, %s28, 4
        %s352 = scalar_lea.vmem %s4, %s351
        %v354 = vld [vmem:[%s291] sm:$0xff]
        %v355 = vpack.c.bf16 %v354, %v354
        %v356 = vld [vmem:[%s300] sm:$0xf]
        %v357 = vld [vmem:[%s300 + $0x4] sm:$0xf]
        %v358 = vld [vmem:[%s300 + $0x8] sm:$0xf]
        %v359 = vld [vmem:[%s300 + $0xc] sm:$0xf]
        %v360 = vld [vmem:[%s349] sm:$0x1]
        %v362 = vlaneseq
        %v363 = vshrl.u32 %v362, 7
        %v364 = vsub.s32 0, %v363
        %v365 = vrot.slane %v360, %v364
        %v371 = vunpack.c.l.b16 %v356
        %v372 = vunpack.c.l.b16 %v357
        %v373 = vunpack.c.l.b16 %v358
        %v374 = vunpack.c.l.b16 %v359
        %v375 = vpack.c.b16 %v372, %v371
        %v376 = vpack.c.b16 %v374, %v373
        %vm379 = vcmask 261120
        %v381 = vsel %vm379, %v355, 0
        %383 = vmatprep.subr.bf16.mxu0 0
        %384 = vmatpush1.bf16.msra.mxu0 %v375
        %385 = vmatprep.subr.bf16.mxu0 0
        %386 = vmatpush1.bf16.msra.mxu0 %v376
        %387 = vmatprep.subr.bf16.mxu0 0
        %388 = vmatpush1.bf16.msra.mxu0 0
        %389 = vmatprep.subr.bf16.mxu0 0
        %390 = vmatpush1.bf16.msra.mxu0 0
        %391 = vmatprep.subr.bf16.mxu0 0
        %392 = vmatpush1.bf16.msra.mxu0 0
        %393 = vmatprep.subr.bf16.mxu0 0
        %394 = vmatpush1.bf16.msra.mxu0 0
        %395 = vmatprep.subr.bf16.mxu0 0
        %396 = vmatpush1.bf16.msra.mxu0 0
        %397 = vmatprep.subr.bf16.mxu0 0
        %398 = vmatpush1.bf16.msra.mxu0 0
        %399 = vmatprep.subr.bf16.mxu0 0
        %400 = vmatpush1.bf16.msra.mxu0 0
        %401 = vmatprep.subr.bf16.mxu0 0
        %402 = vmatpush1.bf16.msra.mxu0 0
        %403 = vmatprep.subr.bf16.mxu0 0
        %404 = vmatpush1.bf16.msra.mxu0 0
        %405 = vmatprep.subr.bf16.mxu0 0
        %406 = vmatpush1.bf16.msra.mxu0 0
        %407 = vmatprep.subr.bf16.mxu0 0
        %408 = vmatpush1.bf16.msra.mxu0 0
        %409 = vmatprep.subr.bf16.mxu0 0
        %410 = vmatpush1.bf16.msra.mxu0 0
        %411 = vmatprep.subr.bf16.mxu0 0
        %412 = vmatpush1.bf16.msra.mxu0 0
        %413 = vmatprep.subr.bf16.mxu0 0
        %414 = vmatpush1.bf16.msra.mxu0 0
        %415 = vmatprep.mubr.bf16.mxu0 0
        %416 = vmatmul.mubr.bf16.gmra.mrb[0].mxu0 %v381
        %v417 = vpop.f32.mrb[0].mxu0
        %v418 = vadd.f32 %v365, %v417
        %v419 = vpop.f32.mrb[0].mxu0
        %v420 = vpop.f32.mrb[0].mxu0
        %v421 = vpop.f32.mrb[0].mxu0
        %422 = vdwg.mxu0
        %v423 = vtanh.pop %v418
        %v424 = vpack.c.bf16 %v423, %v423
        %v425 = vld [vmem:[%s309] sm:$0xf]
        %v426 = vld [vmem:[%s309 + $0x4] sm:$0xf]
        %v427 = vld [vmem:[%s309 + $0x8] sm:$0xf]
        %v428 = vld [vmem:[%s309 + $0xc] sm:$0xf]
        %v429 = vld [vmem:[%s352] sm:$0x1]
        %v431 = vlaneseq
        %v432 = vshrl.u32 %v431, 7
        %v433 = vsub.s32 0, %v432
        %v434 = vrot.slane %v429, %v433
        %v440 = vunpack.c.l.b16 %v425
        %v441 = vunpack.c.l.b16 %v426
        %v442 = vunpack.c.l.b16 %v427
        %v443 = vunpack.c.l.b16 %v428
        %v444 = vpack.c.b16 %v441, %v440
        %v445 = vpack.c.b16 %v443, %v442
        %v449 = vsel %vm379, %v424, 0
        %451 = vmatprep.subr.bf16.mxu0 0
        %452 = vmatpush1.bf16.msra.mxu0 %v444
        %453 = vmatprep.subr.bf16.mxu0 0
        %454 = vmatpush1.bf16.msra.mxu0 %v445
        %455 = vmatprep.subr.bf16.mxu0 0
        %456 = vmatpush1.bf16.msra.mxu0 0
        %457 = vmatprep.subr.bf16.mxu0 0
        %458 = vmatpush1.bf16.msra.mxu0 0
        %459 = vmatprep.subr.bf16.mxu0 0
        %460 = vmatpush1.bf16.msra.mxu0 0
        %461 = vmatprep.subr.bf16.mxu0 0
        %462 = vmatpush1.bf16.msra.mxu0 0
        %463 = vmatprep.subr.bf16.mxu0 0
        %464 = vmatpush1.bf16.msra.mxu0 0
        %465 = vmatprep.subr.bf16.mxu0 0
        %466 = vmatpush1.bf16.msra.mxu0 0
        %467 = vmatprep.subr.bf16.mxu0 0
        %468 = vmatpush1.bf16.msra.mxu0 0
        %469 = vmatprep.subr.bf16.mxu0 0
        %470 = vmatpush1.bf16.msra.mxu0 0
        %471 = vmatprep.subr.bf16.mxu0 0
        %472 = vmatpush1.bf16.msra.mxu0 0
        %473 = vmatprep.subr.bf16.mxu0 0
        %474 = vmatpush1.bf16.msra.mxu0 0
        %475 = vmatprep.subr.bf16.mxu0 0
        %476 = vmatpush1.bf16.msra.mxu0 0
        %477 = vmatprep.subr.bf16.mxu0 0
        %478 = vmatpush1.bf16.msra.mxu0 0
        %479 = vmatprep.subr.bf16.mxu0 0
        %480 = vmatpush1.bf16.msra.mxu0 0
        %481 = vmatprep.subr.bf16.mxu0 0
        %482 = vmatpush1.bf16.msra.mxu0 0
        %483 = vmatprep.mubr.bf16.mxu0 0
        %484 = vmatmul.mubr.bf16.gmra.mrb[0].mxu0 %v449
        %v485 = vpop.f32.mrb[0].mxu0
        %v486 = vadd.f32 %v434, %v485
        %v487 = vpop.f32.mrb[0].mxu0
        %v488 = vpop.f32.mrb[0].mxu0
        %v489 = vpop.f32.mrb[0].mxu0
        %490 = vdwg.mxu0
        %p491 = scmp.eq.s32.totalorder %s28, 0
        // Predicated region
        $region53: #{tpu_custom_call.1} parent=39 // pred_check
          %p492 = pneg %p491
        $region54: #{tpu_custom_call.1} parent=39 // pred_check_branch
          %494 = sbr.rel (%p492) target = $region56
        $region55: #{tpu_custom_call.1} parent=39 // pred_region
          %495 = vst [vmem:[#allocation8] sm:$0xff] %v486
        $region56: #{tpu_custom_call.1} parent=39 // pred_fallthru
          _
        %p496 = scmp.gt.s32.totalorder %s28, 0
        // Predicated region
        $region57: #{tpu_custom_call.1} parent=39 // pred_check
          %p497 = pneg %p496
        $region58: #{tpu_custom_call.1} parent=39 // pred_check_branch
          %499 = sbr.rel (%p497) target = $region60
        $region59: #{tpu_custom_call.1} parent=39 // pred_region
          %v500 = vld [vmem:[#allocation8] sm:$0xff]
          %v501 = vmax.f32 %v500, %v486
          %502 = vst [vmem:[#allocation8] sm:$0xff] %v501
        $region60: #{tpu_custom_call.1} parent=39 // pred_fallthru
          _
        // Predicated region
        $region61: #{tpu_custom_call.1} parent=39 // pred_check
          %p503 = pneg %p185
        $region62: #{tpu_custom_call.1} parent=39 // pred_check_branch
          %505 = sbr.rel (%p503) target = $region64
        $region63: #{tpu_custom_call.1} parent=39 // pred_region
          %s507 = ssub.s32 128, 128
          %508 = vsyncadd [#allocation4], %s507
          %s509 = smul.addr %s27, 128
          %s510 = scalar_lea.hbm %s5, %s509
          %s512 = sshll.u32 [#allocation8], 4
          %s513 = int_to_ptr.vmem [resolvable:$true] %s512
          %515 = dma.vmem_to_hbm [thread:$0]  %s513, 128, %s510, [#allocation4]
        $region64: #{tpu_custom_call.1} parent=39 // pred_fallthru
          _
        // Predicated region
        $region65: #{tpu_custom_call.1} parent=39 // pred_check
          %p516 = pneg %p185
        $region66: #{tpu_custom_call.1} parent=39 // pred_check_branch
          %518 = sbr.rel (%p516) target = $region68
        $region67: #{tpu_custom_call.1} parent=39 // pred_region
          %519 = dma.done [#allocation4], 128
        $region68: #{tpu_custom_call.1} parent=39 // pred_fallthru
          _
      $region40: #{tpu_custom_call.1} parent=5 // pred_fallthru
        _
      %p520 = scmp.le.s32.totalorder 2, %s18
      // Predicated region
      $region69: #{tpu_custom_call.1} parent=5 // pred_check
        %p521 = pneg %p520
      $region70: #{tpu_custom_call.1} parent=5 // pred_check_branch
        %523 = sbr.rel (%p521) target = $region72
      $region71: #{tpu_custom_call.1} parent=5 // pred_region
        %s524 = ssub.s32 %s18, 2
      $region72: #{tpu_custom_call.1} parent=5 // pred_fallthru
        _
    $region6: #{tpu_custom_call.1} parent=1 // loop_footer
      %s22 = sadd.s32 1, %s18
    $region7: #{tpu_custom_call.1} parent=1 // loop_footer_branch
      %17 = sbr.rel target = $region3
    $region8: #{tpu_custom_call.1} parent=1 // loop_exit
      _
    %525 = vsyncpa [#allocation3], 1
    %s526 = scalar_lea.sflag [#allocation3], 1
    %527 = vsyncpa %s526, 1
    %528 = vsyncpa [#allocation6], 1
    %s529 = scalar_lea.sflag [#allocation6], 1
    %530 = vsyncpa %s529, 1
    %531 = vsyncpa [#allocation4], 1
    %s532 = scalar_lea.sflag [#allocation4], 1
    %533 = vsyncpa %s532, 1

</llo_original>
